<compile_context>
chip_gen: v6e
topology: v6e:2x2x1
jax: 0.10.0
libtpu: 0.0.40
codegen_flags: <defaults>
</compile_context>

<pallas_src>
import functools

import jax
import jax.numpy as jnp
from jax import lax
from jax.experimental import pallas as pl
from jax.experimental.pallas import tpu as pltpu

_LANE = 128
_ACC_SUBLANES = 8
_BLOCK_ROWS = 8192            # (8192, 128) f32 block = 4 MiB per operand per buffer
_VMEM_LIMIT_BYTES = 48 << 20  # 16 MiB of input buffers + scratch; fits all generations
_MIN_PALLAS_ELEMS = 1 << 20   # below ~1M elems plain XLA fusion wins


def _round_up(x, m):
    return ((x + m - 1) // m) * m


def _num_tensorcores():
    """Best-effort TensorCore-per-chip count (2 on v7x, 1 on v5e/v6e)."""
    try:
        info = pltpu.get_tpu_info()
    except Exception:
        return 1
    for attr in ("num_cores", "core_count", "num_tensorcores",
                 "tensorcore_count", "cores_per_chip"):
        v = getattr(info, attr, None)
        if isinstance(v, int) and v > 0:
            return v
    return 1


def _mse_kernel(pred_ref, true_ref, out_ref, acc_ref, *,
                n_rows, block_rows, blocks_per_part):
    """Accumulate sum((pred - true)^2) for this partition.

    grid = (P, K): axis 0 = independent partitions ("parallel"),
    axis 1 = sequential reduction over row-blocks ("arbitrary").
    acc_ref is an (8, 128) f32 VMEM scratch holding per-(sublane, lane)
    partial sums; the cross-lane/sublane reduce happens in the wrapper.
    """
    pi = pl.program_id(0)
    ki = pl.program_id(1)

    @pl.when(ki == 0)
    def _():
        acc_ref[...] = jnp.zeros_like(acc_ref)

    d = pred_ref[...].astype(jnp.float32) - true_ref[...].astype(jnp.float32)
    sq = d * d

    def accumulate(vals):
        # Pure VALU adds: fold (block_rows, 128) -> (8, 128); no per-step
        # sublane (XLU) reduce and no tiny scalar stores in steady state.
        acc_ref[...] += jnp.sum(vals.reshape(-1, _ACC_SUBLANES, _LANE), axis=0)

    # A block needs masking iff it extends past the real array: the (at most
    # one) partial last block, or a fully out-of-range block that the
    # index_map clamped (its unclamped block_id puts every row past n_rows,
    # so the mask zeroes the whole contribution).
    block_id = pi * blocks_per_part + ki
    needs_mask = (block_id + 1) * block_rows > n_rows

    @pl.when(jnp.logical_not(needs_mask))
    def _():
        accumulate(sq)

    @pl.when(needs_mask)
    def _():
        row = lax.broadcasted_iota(jnp.int32, (block_rows, _LANE), 0)
        valid = (block_id * block_rows + row) < n_rows
        accumulate(jnp.where(valid, sq, 0.0))

    @pl.when(ki == pl.num_programs(1) - 1)
    def _():
        # Lane-dense (8, 128) store, once per partition.
        out_ref[...] = acc_ref[...]


def _mse_loss_pallas(u_pred, u_true):
    assert u_pred.shape == u_true.shape, "MSELoss expects matching shapes"
    n = int(u_pred.size)

    p = u_pred.reshape(-1)
    t = u_true.reshape(-1)

    # Lane pad only (< 128 zero elements, only when numel % 128 != 0) so the
    # flat vector reshapes to a lane-dense (rows, 128) slab.  Padded slots are
    # zero in BOTH operands -> contribute 0 to the sum.
    rem = n % _LANE
    if rem:
        pad = _LANE - rem
        p = jnp.pad(p, (0, pad))
        t = jnp.pad(t, (0, pad))
    rows = p.shape[0] // _LANE
    p2 = p.reshape(rows, _LANE)
    t2 = t.reshape(rows, _LANE)

    # Big blocks for HBM efficiency, shrunk for tiny inputs so we don't
    # allocate/DMA a 4 MiB buffer for a few rows.  Multiple of 32 sublanes
    # keeps any input dtype's tile constraint satisfied.
    block_rows = min(_BLOCK_ROWS, _round_up(rows, 32))
    num_blocks = pl.cdiv(rows, block_rows)
    num_parts = max(1, min(_num_tensorcores(), num_blocks))
    blocks_per_part = pl.cdiv(num_blocks, num_parts)

    def in_index_map(pi, ki):
        # Clamp fully out-of-range block ids (when num_blocks % P != 0); the
        # in-kernel masked path zeroes their contribution.
        return (jnp.minimum(pi * blocks_per_part + ki, num_blocks - 1), 0)

    kernel = functools.partial(
        _mse_kernel,
        n_rows=rows,
        block_rows=block_rows,
        blocks_per_part=blocks_per_part,
    )

    # TODO(synk): on v7x, verify in the Mosaic dump that the leading
    # "parallel" axis is actually core-sharded; if not, switch it to
    # pltpu.CORE_PARALLEL.
    partial_sums = pl.pallas_call(
        kernel,
        out_shape=jax.ShapeDtypeStruct((num_parts, _ACC_SUBLANES, _LANE),
                                       jnp.float32),
        grid_spec=pltpu.PrefetchScalarGridSpec(
            num_scalar_prefetch=0,
            grid=(num_parts, blocks_per_part),
            in_specs=[
                pl.BlockSpec((block_rows, _LANE), in_index_map),
                pl.BlockSpec((block_rows, _LANE), in_index_map),
            ],
            out_specs=pl.BlockSpec((None, _ACC_SUBLANES, _LANE),
                                   lambda pi, ki: (pi, 0, 0)),
            scratch_shapes=[pltpu.VMEM((_ACC_SUBLANES, _LANE), jnp.float32)],
        ),
        compiler_params=pltpu.CompilerParams(
            dimension_semantics=("parallel", "arbitrary"),
            vmem_limit_bytes=_VMEM_LIMIT_BYTES,
        ),
    )(p2, t2)

    return jnp.sum(partial_sums) / n


def mse_loss(u_pred, u_true, *, force_pallas=False):
    """nn.MSELoss(reduction='mean') forward."""
    n = int(u_pred.size)
    if n == 0 or (not force_pallas and n < _MIN_PALLAS_ELEMS):
        # Small inputs: kernel launch + pipeline prologue dominate; plain XLA
        # fusion is faster and numerically identical.
        d = u_pred.astype(jnp.float32) - u_true.astype(jnp.float32)
        return jnp.mean(d * d)
    return _mse_loss_pallas(u_pred, u_true)


if __name__ == "__main__":
    key = jax.random.PRNGKey(0)
    k1, k2, k3, k4, k5, k6 = jax.random.split(key, 6)

    # Primary small NCHW-like demo shape; force the Pallas path so the kernel
    # itself is exercised (the auto path would take the tiny-input fallback).
    u_pred = jax.random.normal(k1, (2, 4, 16, 16), dtype=jnp.float32)
    u_true = jax.random.normal(k2, (2, 4, 16, 16), dtype=jnp.float32)
    loss = jax.block_until_ready(mse_loss(u_pred, u_true, force_pallas=True))
    ref = jnp.mean((u_pred - u_true) ** 2)
    assert jnp.allclose(loss, ref, rtol=1e-5, atol=1e-6), (loss, ref)

    # Ragged element count (not a multiple of 128): exercises lane pad +
    # in-kernel masked path for the partial block.
    a = jax.random.normal(k3, (3, 5, 37, 23), dtype=jnp.float32)
    b = jax.random.normal(k4, (3, 5, 37, 23), dtype=jnp.float32)
    loss2 = jax.block_until_ready(mse_loss(a, b, force_pallas=True))
    ref2 = jnp.mean((a - b) ** 2)
    assert jnp.allclose(loss2, ref2, rtol=1e-5, atol=1e-6), (loss2, ref2)

    # Larger input (2M elems -> 2 full 8192-row blocks): exercises the
    # unmasked fast path and multi-block accumulation across the reduction
    # axis via the auto dispatch.  Looser rtol: f32 accumulation-order
    # difference vs. XLA's own reduction over 2M elements.
    c = jax.random.normal(k5, (8, 4, 256, 256), dtype=jnp.float32)
    d = jax.random.normal(k6, (8, 4, 256, 256), dtype=jnp.float32)
    loss3 = jax.block_until_ready(mse_loss(c, d))
    ref3 = jnp.mean((c - d) ** 2)
    assert jnp.allclose(loss3, ref3, rtol=1e-4, atol=1e-6), (loss3, ref3)

    print("KERNEL_OK")
</pallas_src>

<mosaic_0001>
module attributes {stable_mosaic.version = 11 : i64} {
  func.func @_mse_kernel(%arg0: i32, %arg1: i32, %arg2: memref<32x128xf32, #tpu.memory_space<vmem>>, %arg3: memref<32x128xf32, #tpu.memory_space<vmem>>, %arg4: memref<1x8x128xf32, #tpu.memory_space<vmem>>, %arg5: memref<8x128xf32, #tpu.memory_space<vmem>>) attributes {dimension_semantics = [#tpu.dimension_semantics<parallel>, #tpu.dimension_semantics<arbitrary>], iteration_bounds = array<i64: 1, 1>, scalar_prefetch = 0 : i64, scratch_operands = 1 : i64, tpu.core_type = #tpu.core_type<tc>, window_params = [{transform_indices = @transform_0, window_bounds = array<i64: 32, 128>}, {transform_indices = @transform_1, window_bounds = array<i64: 32, 128>}, {transform_indices = @transform_2, window_bounds = array<i64: 1, 8, 128>}]} {
    %c0_i32 = arith.constant 0 : i32
    %0 = arith.cmpi eq, %arg1, %c0_i32 : i32
    %1 = arith.extui %0 : i1 to i32
    %c0_i32_0 = arith.constant 0 : i32
    %2 = arith.cmpi ne, %1, %c0_i32_0 : i32
    scf.if %2 {
      %cst = arith.constant 0.000000e+00 : f32
      %20 = vector.broadcast %cst : f32 to vector<8x128xf32>
      %c0_9 = arith.constant 0 : index
      %c0_10 = arith.constant 0 : index
      %21 = vector.load %arg5[%c0_9, %c0_10] : memref<8x128xf32, #tpu.memory_space<vmem>>, vector<8x128xf32>
      tpu.vector_store %arg5[%c0_9, %c0_10], %20 {strides = array<i32>} : memref<8x128xf32, #tpu.memory_space<vmem>>, vector<8x128xf32>,
    } else {
    }
    %c0 = arith.constant 0 : index
    %c0_1 = arith.constant 0 : index
    %3 = vector.load %arg2[%c0, %c0_1] : memref<32x128xf32, #tpu.memory_space<vmem>>, vector<32x128xf32>
    %c0_2 = arith.constant 0 : index
    %c0_3 = arith.constant 0 : index
    %4 = vector.load %arg3[%c0_2, %c0_3] : memref<32x128xf32, #tpu.memory_space<vmem>>, vector<32x128xf32>
    %5 = arith.subf %3, %4 : vector<32x128xf32>
    %6 = arith.mulf %5, %5 : vector<32x128xf32>
    %c1_i32 = arith.constant 1 : i32
    %7 = arith.muli %arg0, %c1_i32 : i32
    %8 = arith.addi %7, %arg1 : i32
    %c1_i32_4 = arith.constant 1 : i32
    %9 = arith.addi %8, %c1_i32_4 : i32
    %c32_i32 = arith.constant 32 : i32
    %10 = arith.muli %9, %c32_i32 : i32
    %c16_i32 = arith.constant 16 : i32
    %11 = arith.cmpi sgt, %10, %c16_i32 : i32
    %true = arith.constant true
    %12 = arith.xori %11, %true : i1
    %13 = arith.extui %12 : i1 to i32
    %c0_i32_5 = arith.constant 0 : i32
    %14 = arith.cmpi ne, %13, %c0_i32_5 : i32
    scf.if %14 {
      %c0_9 = arith.constant 0 : index
      %c0_10 = arith.constant 0 : index
      %20 = vector.load %arg5[%c0_9, %c0_10] : memref<8x128xf32, #tpu.memory_space<vmem>>, vector<8x128xf32>
      %21 = vector.shape_cast %6 : vector<32x128xf32> to vector<4x8x128xf32>
      %cst = arith.constant dense<0.000000e+00> : vector<8x128xf32>
      %22 = vector.multi_reduction <add>, %21, %cst [0] : vector<4x8x128xf32> to vector<8x128xf32>
      %23 = arith.addf %20, %22 : vector<8x128xf32>
      %c0_11 = arith.constant 0 : index
      %c0_12 = arith.constant 0 : index
      %24 = vector.load %arg5[%c0_11, %c0_12] : memref<8x128xf32, #tpu.memory_space<vmem>>, vector<8x128xf32>
      tpu.vector_store %arg5[%c0_11, %c0_12], %23 {strides = array<i32>} : memref<8x128xf32, #tpu.memory_space<vmem>>, vector<8x128xf32>,
    } else {
    }
    %15 = arith.extui %11 : i1 to i32
    %c0_i32_6 = arith.constant 0 : i32
    %16 = arith.cmpi ne, %15, %c0_i32_6 : i32
    scf.if %16 {
      %20 = tpu.iota {dimensions = array<i32: 0>} : vector<32x128xi32>
      %c32_i32_9 = arith.constant 32 : i32
      %21 = arith.muli %8, %c32_i32_9 : i32
      %22 = vector.broadcast %21 : i32 to vector<32x128xi32>
      %23 = arith.addi %22, %20 : vector<32x128xi32>
      %c16_i32_10 = arith.constant 16 : i32
      %24 = vector.broadcast %c16_i32_10 : i32 to vector<32x128xi32>
      %25 = arith.cmpi slt, %23, %24 : vector<32x128xi32>
      %cst = arith.constant 0.000000e+00 : f32
      %26 = vector.broadcast %cst : f32 to vector<32x128xf32>
      %27 = arith.select %25, %6, %26 : vector<32x128xi1>, vector<32x128xf32>
      %c0_11 = arith.constant 0 : index
      %c0_12 = arith.constant 0 : index
      %28 = vector.load %arg5[%c0_11, %c0_12] : memref<8x128xf32, #tpu.memory_space<vmem>>, vector<8x128xf32>
      %29 = vector.shape_cast %27 : vector<32x128xf32> to vector<4x8x128xf32>
      %cst_13 = arith.constant dense<0.000000e+00> : vector<8x128xf32>
      %30 = vector.multi_reduction <add>, %29, %cst_13 [0] : vector<4x8x128xf32> to vector<8x128xf32>
      %31 = arith.addf %28, %30 : vector<8x128xf32>
      %c0_14 = arith.constant 0 : index
      %c0_15 = arith.constant 0 : index
      %32 = vector.load %arg5[%c0_14, %c0_15] : memref<8x128xf32, #tpu.memory_space<vmem>>, vector<8x128xf32>
      tpu.vector_store %arg5[%c0_14, %c0_15], %31 {strides = array<i32>} : memref<8x128xf32, #tpu.memory_space<vmem>>, vector<8x128xf32>,
    } else {
    }
    %c0_i32_7 = arith.constant 0 : i32
    %17 = arith.cmpi eq, %arg1, %c0_i32_7 : i32
    %18 = arith.extui %17 : i1 to i32
    %c0_i32_8 = arith.constant 0 : i32
    %19 = arith.cmpi ne, %18, %c0_i32_8 : i32
    scf.if %19 {
      %c0_9 = arith.constant 0 : index
      %c0_10 = arith.constant 0 : index
      %20 = vector.load %arg5[%c0_9, %c0_10] : memref<8x128xf32, #tpu.memory_space<vmem>>, vector<8x128xf32>
      %c0_11 = arith.constant 0 : index
      %c0_12 = arith.constant 0 : index
      %c0_13 = arith.constant 0 : index
      %21 = vector.load %arg4[%c0_11, %c0_12, %c0_13] : memref<1x8x128xf32, #tpu.memory_space<vmem>>, vector<1x8x128xf32>
      %22 = vector.shape_cast %21 : vector<1x8x128xf32> to vector<8x128xf32>
      %23 = vector.shape_cast %20 : vector<8x128xf32> to vector<1x8x128xf32>
      tpu.vector_store %arg4[%c0_11, %c0_12, %c0_13], %23 {strides = array<i32>} : memref<1x8x128xf32, #tpu.memory_space<vmem>>, vector<1x8x128xf32>,
    } else {
    }
    return
  }
  func.func @transform_0(%arg0: i32, %arg1: i32) -> (i32, i32) {
    %c1_i32 = arith.constant 1 : i32
    %0 = arith.muli %arg0, %c1_i32 : i32
    %1 = arith.addi %0, %arg1 : i32
    %c0_i32 = arith.constant 0 : i32
    %2 = arith.minsi %1, %c0_i32 : i32
    %c0_i32_0 = arith.constant 0 : i32
    %c0_i32_1 = arith.constant 0 : i32
    return %2, %c0_i32_0 : i32, i32
  }
  func.func @transform_1(%arg0: i32, %arg1: i32) -> (i32, i32) {
    %c1_i32 = arith.constant 1 : i32
    %0 = arith.muli %arg0, %c1_i32 : i32
    %1 = arith.addi %0, %arg1 : i32
    %c0_i32 = arith.constant 0 : i32
    %2 = arith.minsi %1, %c0_i32 : i32
    %c0_i32_0 = arith.constant 0 : i32
    %c0_i32_1 = arith.constant 0 : i32
    return %2, %c0_i32_0 : i32, i32
  }
  func.func @transform_2(%arg0: i32, %arg1: i32) -> (i32, i32, i32) {
    %c0_i32 = arith.constant 0 : i32
    %c0_i32_0 = arith.constant 0 : i32
    %c0_i32_1 = arith.constant 0 : i32
    return %arg0, %c0_i32, %c0_i32_0 : i32, i32, i32
  }
}

</mosaic_0001>

<llo_original>
// kernel: tpu_custom_call.1
$region0: #{tpu_custom_call.1}
  #allocation0 [shape = 'u32[]', space=smem, size = 0x4, offset = 0x4, fixed_abs, tag = 'smem constant byte address 0x4 - core index']
  #allocation1 [shape = 'u32[144,128]{1,0:T(1,128)}', space=vmem, size = 0x12000, scoped, tag = 'internal scratch']
  #allocation2 [shape = 'f32[8,128]{1,0:T(8,128)}', space=vmem, size = 0x1000, scoped, tag = 'scratch operand']
  %s0 = inlined_call_operand.hbm [shape: f32[16,128], index: 0, kind: input, shape index: {}]
  %s1 = inlined_call_operand.hbm [shape: f32[16,128], index: 1, kind: input, shape index: {}]
  %s2 = inlined_call_operand.hbm [shape: f32[1,8,128], index: 2, kind: output, shape index: {}]
  %s3 = sld [smem:[#allocation0]]
  $region42: #{tpu_custom_call.1} parent=0
    _
  %s5 = ssub.s32 1, %s3
  %s6 = scalar_select 0, %s5, %s3
  $region1: #{tpu_custom_call.1} parent=0
    #allocation3 [shape = 'u8[16384]{0}', space=vmem, size = 0x4000, scoped, tag = 'input window, operand 0, single buffered']
    #allocation4 [shape = 's32[1]{0}', space=sflag, size = 0x4, scoped, tag = 'scoped memory for tpu_custom_call.1']
    #allocation5 [shape = 's32[1]{0}', space=sflag, size = 0x4, scoped, tag = 'scoped memory for tpu_custom_call.1']
    #allocation6 [shape = 'u8[16384]{0}', space=vmem, size = 0x4000, scoped, tag = 'input window, operand 1, single buffered']
    #allocation7 [shape = 's32[1]{0}', space=sflag, size = 0x4, scoped, tag = 'scoped memory for tpu_custom_call.1']
    #allocation8 [shape = 'u8[4096]{0}', space=vmem, size = 0x1000, scoped, tag = 'output window, operand 0, single buffered']
    %7 = vsyncpa [#allocation4], 0
    %8 = vsyncpa [#allocation7], 0
    %9 = vsyncpa [#allocation5], 0
    // Predicated region
    $region2: #{tpu_custom_call.1} parent=1 // pred_check
      _
    $region3: #{tpu_custom_call.1} parent=1 // pred_check_branch
      %11 = sbr.rel (0) target = $region5
    $region4: #{tpu_custom_call.1} parent=1 // pred_region
      %s12 = sadd.s32 0, 0
      %p13 = scmp.lt.s32.totalorder %s12, 0
      %s14 = scalar_select %p13, %s12, 0
      %s15 = smul.u32 4, %s14
      %s16 = ssub.s32 2, %s15
      %s17 = smul.u32 128, %s16
      %s19 = ssub.s32 512, %s17
      %20 = vsyncadd [#allocation4], %s19
      %p21 = scmp.ne.s32.totalorder 0, %s17
      %s22 = smul.addr %s15, 128
      %s23 = scalar_lea.hbm %s0, %s22
      %s24 = smul.u32 8, %s16
      %s25 = sshll.u32 [#allocation3], 4
      %s26 = int_to_ptr.vmem [resolvable:$true] %s25
      %s27 = sshll.u32 %s24, 4
      %31 = dma.hbm_to_vmem [thread:$0]  (%p21), %s23, %s27, %s26, [#allocation4], 128, 128, 8
    $region5: #{tpu_custom_call.1} parent=1 // pred_fallthru
      _
    // Predicated region
    $region6: #{tpu_custom_call.1} parent=1 // pred_check
      _
    $region7: #{tpu_custom_call.1} parent=1 // pred_check_branch
      %33 = sbr.rel (0) target = $region9
    $region8: #{tpu_custom_call.1} parent=1 // pred_region
      %s34 = sadd.s32 0, 0
      %p35 = scmp.lt.s32.totalorder %s34, 0
      %s36 = scalar_select %p35, %s34, 0
      %s37 = smul.u32 4, %s36
      %s38 = ssub.s32 2, %s37
      %s39 = smul.u32 128, %s38
      %s41 = ssub.s32 512, %s39
      %42 = vsyncadd [#allocation7], %s41
      %p43 = scmp.ne.s32.totalorder 0, %s39
      %s44 = smul.addr %s37, 128
      %s45 = scalar_lea.hbm %s1, %s44
      %s46 = smul.u32 8, %s38
      %s47 = sshll.u32 [#allocation6], 4
      %s48 = int_to_ptr.vmem [resolvable:$true] %s47
      %s49 = sshll.u32 %s46, 4
      %53 = dma.hbm_to_vmem [thread:$0]  (%p43), %s45, %s49, %s48, [#allocation7], 128, 128, 8
    $region9: #{tpu_custom_call.1} parent=1 // pred_fallthru
      _
    // Predicated region
    $region10: #{tpu_custom_call.1} parent=1 // pred_check
      _
    $region11: #{tpu_custom_call.1} parent=1 // pred_check_branch
      %55 = sbr.rel (0) target = $region13
    $region12: #{tpu_custom_call.1} parent=1 // pred_region
      %56 = dma.done [#allocation4], 512
    $region13: #{tpu_custom_call.1} parent=1 // pred_fallthru
      _
    // Predicated region
    $region14: #{tpu_custom_call.1} parent=1 // pred_check
      _
    $region15: #{tpu_custom_call.1} parent=1 // pred_check_branch
      %58 = sbr.rel (0) target = $region17
    $region16: #{tpu_custom_call.1} parent=1 // pred_region
      %59 = dma.done [#allocation7], 512
    $region17: #{tpu_custom_call.1} parent=1 // pred_fallthru
      _
    %s60 = sadd.s32 0, 0
    %p61 = scmp.lt.s32.totalorder %s60, 0
    %s62 = scalar_select %p61, %s60, 0
    %s63 = smul.u32 4, %s62
    %s64 = ssub.s32 2, %s63
    %s65 = smul.u32 128, %s64
    %s66 = sadd.s32 0, 0
    %p67 = scmp.lt.s32.totalorder %s66, 0
    %s68 = scalar_select %p67, %s66, 0
    %s69 = smul.u32 4, %s68
    %s70 = ssub.s32 2, %s69
    %s71 = smul.u32 128, %s70
    %p72 = scmp.eq.s32.totalorder 0, 0
    // Predicated region
    $region18: #{tpu_custom_call.1} parent=1 // pred_check
      %p73 = pneg %p72
    $region19: #{tpu_custom_call.1} parent=1 // pred_check_branch
      %75 = sbr.rel (%p73) target = $region21
    $region20: #{tpu_custom_call.1} parent=1 // pred_region
      %76 = vst [vmem:[#allocation2] sm:$0xff] 0.0
    $region21: #{tpu_custom_call.1} parent=1 // pred_fallthru
      _
    %v77 = vld [vmem:[#allocation3] sm:$0xff]
    %v78 = vld [vmem:[#allocation3 + $0x8] sm:$0xff]
    %v79 = vld [vmem:[#allocation3 + $0x10] sm:$0xff]
    %v80 = vld [vmem:[#allocation3 + $0x18] sm:$0xff]
    %v81 = vld [vmem:[#allocation6] sm:$0xff]
    %v82 = vld [vmem:[#allocation6 + $0x8] sm:$0xff]
    %v83 = vld [vmem:[#allocation6 + $0x10] sm:$0xff]
    %v84 = vld [vmem:[#allocation6 + $0x18] sm:$0xff]
    %v85 = vsub.f32 %v77, %v81
    %v86 = vsub.f32 %v78, %v82
    %v87 = vsub.f32 %v79, %v83
    %v88 = vsub.f32 %v80, %v84
    %v89 = vmul.f32 %v85, %v85
    %v90 = vmul.f32 %v86, %v86
    %v91 = vmul.f32 %v87, %v87
    %v92 = vmul.f32 %v88, %v88
    %s93 = sadd.s32 0, 0
    %s94 = sadd.s32 %s93, 1
    %s95 = smul.u32 %s94, 32
    %p96 = scmp.gt.s32.totalorder %s95, 16
    %p97 = scmp.le.s32.totalorder %s95, 16
    // Predicated region
    $region22: #{tpu_custom_call.1} parent=1 // pred_check
      %p98 = pneg %p97
    $region23: #{tpu_custom_call.1} parent=1 // pred_check_branch
      %100 = sbr.rel (%p98) target = $region25
    $region24: #{tpu_custom_call.1} parent=1 // pred_region
      %v101 = vld [vmem:[#allocation2] sm:$0xff]
      %v102 = vadd.f32 %v89, %v90
      %v103 = vadd.f32 %v102, %v91
      %v104 = vadd.f32 %v103, %v92
      %v105 = vadd.f32 %v101, %v104
      %106 = vst [vmem:[#allocation2] sm:$0xff] %v105
    $region25: #{tpu_custom_call.1} parent=1 // pred_fallthru
      _
    // Predicated region
    $region26: #{tpu_custom_call.1} parent=1 // pred_check
      %p107 = pneg %p96
    $region27: #{tpu_custom_call.1} parent=1 // pred_check_branch
      %109 = sbr.rel (%p107) target = $region29
    $region28: #{tpu_custom_call.1} parent=1 // pred_region
      %v110 = vlaneseq
      %v111 = vshrl.u32 %v110, 7
      %v112 = vadd.s32 %v111, 8
      %v113 = vadd.s32 %v111, 16
      %v114 = vadd.s32 %v111, 24
      %s115 = smul.u32 %s93, 32
      %v116 = vstv %s115
      %v117 = vadd.s32 %v116, %v111
      %v118 = vadd.s32 %v116, %v112
      %v119 = vadd.s32 %v116, %v113
      %v120 = vadd.s32 %v116, %v114
      %vm121 = vcmp.lt.s32.totalorder %v117, 16
      %vm122 = vcmp.lt.s32.totalorder %v118, 16
      %vm123 = vcmp.lt.s32.totalorder %v119, 16
      %vm124 = vcmp.lt.s32.totalorder %v120, 16
      %v125 = vsel %vm121, %v89, 0.0
      %v126 = vsel %vm122, %v90, 0.0
      %v127 = vsel %vm123, %v91, 0.0
      %v128 = vsel %vm124, %v92, 0.0
      %v129 = vld [vmem:[#allocation2] sm:$0xff]
      %v130 = vadd.f32 %v125, %v126
      %v131 = vadd.f32 %v130, %v127
      %v132 = vadd.f32 %v131, %v128
      %v133 = vadd.f32 %v129, %v132
      %134 = vst [vmem:[#allocation2] sm:$0xff] %v133
    $region29: #{tpu_custom_call.1} parent=1 // pred_fallthru
      _
    // Predicated region
    $region30: #{tpu_custom_call.1} parent=1 // pred_check
      %p135 = pneg %p72
    $region31: #{tpu_custom_call.1} parent=1 // pred_check_branch
      %137 = sbr.rel (%p135) target = $region33
    $region32: #{tpu_custom_call.1} parent=1 // pred_region
      %v138 = vld [vmem:[#allocation2] sm:$0xff]
      %139 = vst [vmem:[#allocation8] sm:$0xff] %v138
    $region33: #{tpu_custom_call.1} parent=1 // pred_fallthru
      _
    // Predicated region
    $region34: #{tpu_custom_call.1} parent=1 // pred_check
      _
    $region35: #{tpu_custom_call.1} parent=1 // pred_check_branch
      %141 = sbr.rel (0) target = $region37
    $region36: #{tpu_custom_call.1} parent=1 // pred_region
      %s143 = ssub.s32 128, 128
      %144 = vsyncadd [#allocation5], %s143
      %s146 = sshll.u32 [#allocation8], 4
      %s147 = int_to_ptr.vmem [resolvable:$true] %s146
      %149 = dma.vmem_to_hbm [thread:$0]  %s147, 128, %s2, [#allocation5]
    $region37: #{tpu_custom_call.1} parent=1 // pred_fallthru
      _
    // Predicated region
    $region38: #{tpu_custom_call.1} parent=1 // pred_check
      _
    $region39: #{tpu_custom_call.1} parent=1 // pred_check_branch
      %151 = sbr.rel (0) target = $region41
    $region40: #{tpu_custom_call.1} parent=1 // pred_region
      %152 = dma.done [#allocation5], 128
    $region41: #{tpu_custom_call.1} parent=1 // pred_fallthru
      _
    %153 = vsyncpa [#allocation4], 1
    %154 = vsyncpa [#allocation7], 1
    %155 = vsyncpa [#allocation5], 1

</llo_original>
